<compile_context>
chip_gen: v7x
topology: tpu7x:2x2x1
jax: 0.10.0
libtpu: 0.0.40
codegen_flags: <defaults>
</compile_context>

<pallas_src>
import functools

import jax
import jax.numpy as jnp
from jax.experimental import pallas as pl
from jax.experimental.pallas import tpu as pltpu


# Packed-parameter layout (row starts aligned to the 8-sublane granule):
#   w_slab (56, 32) f32:  rows  0:32, cols 0:8  -> W1 (32, 8)
#                         rows 32:40, cols 0:32 -> W2 (8, 32)
#                         rows 40:44, cols 0:8  -> W3 (4, 8)
#                         rows 48:49, cols 0:4  -> W4 (1, 4)
#   b_slab (56, 1)  f32:  same row offsets for b1..b4.
_W1, _W2, _W3, _W4 = (0, 32), (32, 40), (40, 44), (48, 49)


def dnn_kernel(x_ref, w_ref, b_ref, o_ref):
    """One batch tile of the fused MLP.

    x_ref: (8, B_TILE)   features on sublanes, batch on lanes (lane-dense)
    w_ref: (56, 32)      packed weights, (out, in) layout, VMEM-resident
    b_ref: (56, 1)       packed biases, VMEM-resident
    o_ref: (1, B_TILE)   lane-dense output tile (unmasked vector stores)
    """

    def sigmoid(v):
        # exp and the approximate reciprocal both ride the EUP slot; the
        # explicit f32 divide (multi-op VPU Newton sequence) is avoided.
        return pl.reciprocal(1.0 + jnp.exp(-v), approx=True)

    x = x_ref[...]                                                      # (8, B)

    w1 = w_ref[_W1[0]:_W1[1], 0:8]
    b1 = b_ref[_W1[0]:_W1[1], :]
    h1 = sigmoid(jnp.dot(w1, x, preferred_element_type=jnp.float32) + b1)    # (32, B)

    w2 = w_ref[_W2[0]:_W2[1], 0:32]
    b2 = b_ref[_W2[0]:_W2[1], :]
    h2 = sigmoid(jnp.dot(w2, h1, preferred_element_type=jnp.float32) + b2)   # (8, B)

    w3 = w_ref[_W3[0]:_W3[1], 0:8]
    b3 = b_ref[_W3[0]:_W3[1], :]
    h3 = sigmoid(jnp.dot(w3, h2, preferred_element_type=jnp.float32) + b3)   # (4, B)

    w4 = w_ref[_W4[0]:_W4[1], 0:4]
    b4 = b_ref[_W4[0]:_W4[1], :]
    h4 = sigmoid(jnp.dot(w4, h3, preferred_element_type=jnp.float32) + b4)   # (1, B)

    o_ref[...] = h4.astype(o_ref.dtype)


def pack_params(params):
    """Pack 4x(W, b) (PyTorch layout: W=(out,in), b=(out,)) into two slabs."""
    w1, b1, w2, b2, w3, b3, w4, b4 = params
    w_slab = jnp.zeros((56, 32), jnp.float32)
    b_slab = jnp.zeros((56, 1), jnp.float32)
    for (r0, r1), w, b in ((_W1, w1, b1), (_W2, w2, b2),
                           (_W3, w3, b3), (_W4, w4, b4)):
        w_slab = w_slab.at[r0:r1, 0:w.shape[1]].set(w)
        b_slab = b_slab.at[r0:r1, 0].set(b)
    return w_slab, b_slab


@functools.partial(jax.jit, static_argnames=("b_tile",))
def dnn_forward(x, params, *, b_tile=512):
    """x: (B, 8) f32 (PyTorch nn.Linear convention) -> (B, 1) f32."""
    B = x.shape[0]
    w_slab, b_slab = pack_params(params)

    # Batch rides the 128-lane axis inside the kernel: present x transposed.
    # b_tile ~512 keeps the largest live intermediate (h1 = (32, b_tile) f32)
    # at ~16 vregs while per-step DMA stays well above grid-step overhead.
    b_tile = min(b_tile, pl.cdiv(B, 128) * 128)       # multiple of 128
    b_pad = pl.cdiv(B, b_tile) * b_tile
    xt = x.T                                          # (8, B): layout plumbing
    if b_pad != B:
        xt = jnp.pad(xt, ((0, 0), (0, b_pad - B)))    # zero-pad batch columns

    out = pl.pallas_call(
        dnn_kernel,
        out_shape=jax.ShapeDtypeStruct((1, b_pad), jnp.float32),
        grid_spec=pltpu.PrefetchScalarGridSpec(
            num_scalar_prefetch=0,
            grid=(b_pad // b_tile,),
            in_specs=[
                pl.BlockSpec((8, b_tile), lambda i: (0, i)),   # x stream, pipelined
                pl.BlockSpec((56, 32), lambda i: (0, 0)),      # weights, resident
                pl.BlockSpec((56, 1), lambda i: (0, 0)),       # biases, resident
            ],
            out_specs=pl.BlockSpec((1, b_tile), lambda i: (0, i)),
        ),
        compiler_params=pltpu.CompilerParams(
            # Batch axis is embarrassingly parallel: shards across the two
            # TensorCores on v7x, harmless no-op on v5e/v6e.
            dimension_semantics=("parallel",),
        ),
    )(xt, w_slab, b_slab)

    return out[:, :B].T                               # back to (B, 1)


def init_params(key):
    """PyTorch-layout params: W=(out,in), b=(out,), U(-1/sqrt(fan_in), +)."""
    dims = [(8, 32), (32, 8), (8, 4), (4, 1)]
    params = []
    for fan_in, fan_out in dims:
        key, kw, kb = jax.random.split(key, 3)
        bound = 1.0 / (fan_in ** 0.5)
        w = jax.random.uniform(kw, (fan_out, fan_in), jnp.float32,
                               minval=-bound, maxval=bound)
        b = jax.random.uniform(kb, (fan_out,), jnp.float32,
                               minval=-bound, maxval=bound)
        params += [w, b]
    return tuple(params)


def dnn_reference(x, params):
    """Plain-JAX reference identical to the PyTorch forward pass."""
    w1, b1, w2, b2, w3, b3, w4, b4 = params
    h = jax.nn.sigmoid(x @ w1.T + b1)
    h = jax.nn.sigmoid(h @ w2.T + b2)
    h = jax.nn.sigmoid(h @ w3.T + b3)
    h = jax.nn.sigmoid(h @ w4.T + b4)
    return h


if __name__ == "__main__":
    key = jax.random.PRNGKey(0)
    key, kx = jax.random.split(key)

    batch = 1000   # not a multiple of the 512-wide tile: exercises pad + 2-step grid
    x = jax.random.normal(kx, (batch, 8), dtype=jnp.float32)
    params = init_params(key)

    y = jax.block_until_ready(dnn_forward(x, params))
    y_ref = dnn_reference(x, params)

    assert y.shape == (batch, 1)
    # Tolerance relaxed vs. 1e-5 because sigmoid uses the EUP approximate
    # reciprocal (pl.reciprocal(approx=True)); observed error is ~1e-3 worst case.
    assert jnp.allclose(y, y_ref, atol=5e-3, rtol=0.0), \
        float(jnp.max(jnp.abs(y - y_ref)))
    assert bool(jnp.all(jnp.isfinite(y)))

    print("KERNEL_OK")
</pallas_src>

<mosaic_0001>
module attributes {stable_mosaic.version = 11 : i64} {
  func.func @dnn_kernel(%arg0: i32, %arg1: memref<8x512xf32, #tpu.memory_space<vmem>>, %arg2: memref<56x32xf32, #tpu.memory_space<vmem>>, %arg3: memref<56x1xf32, #tpu.memory_space<vmem>>, %arg4: memref<1x512xf32, #tpu.memory_space<vmem>>) attributes {dimension_semantics = [#tpu.dimension_semantics<parallel>], iteration_bounds = array<i64: 2>, scalar_prefetch = 0 : i64, scratch_operands = 0 : i64, tpu.core_type = #tpu.core_type<tc>, window_params = [{transform_indices = @transform_0, window_bounds = array<i64: 8, 512>}, {pipeline_mode = #tpu.pipeline_mode<synchronous>, transform_indices = @transform_1, window_bounds = array<i64: 56, 32>}, {pipeline_mode = #tpu.pipeline_mode<synchronous>, transform_indices = @transform_2, window_bounds = array<i64: 56, 1>}, {transform_indices = @transform_3, window_bounds = array<i64: 1, 512>}]} {
    %c0 = arith.constant 0 : index
    %c0_0 = arith.constant 0 : index
    %0 = vector.load %arg1[%c0, %c0_0] : memref<8x512xf32, #tpu.memory_space<vmem>>, vector<8x512xf32>
    %c0_1 = arith.constant 0 : index
    %c0_2 = arith.constant 0 : index
    %1 = vector.load %arg2[%c0_1, %c0_2] : memref<56x32xf32, #tpu.memory_space<vmem>>, vector<32x8xf32>
    %c0_3 = arith.constant 0 : index
    %c0_4 = arith.constant 0 : index
    %2 = vector.load %arg3[%c0_3, %c0_4] : memref<56x1xf32, #tpu.memory_space<vmem>>, vector<32x1xf32>
    %cst = arith.constant dense<0.000000e+00> : vector<32x512xf32>
    %3 = tpu.matmul %1, %0, %cst {dimension_numbers = #tpu.dot_dimension_numbers<[1], [0], [0], [1], [0, 0, 1, 1], [], []>} : vector<32x8xf32>, vector<8x512xf32>, vector<32x512xf32> -> vector<32x512xf32>
    %4 = vector.broadcast %2 : vector<32x1xf32> to vector<32x512xf32>
    %5 = arith.addf %3, %4 : vector<32x512xf32>
    %cst_5 = arith.constant 0.000000e+00 : f32
    %6 = vector.broadcast %cst_5 : f32 to vector<32x512xf32>
    %7 = arith.subf %6, %5 : vector<32x512xf32>
    %8 = math.exp %7 : vector<32x512xf32>
    %cst_6 = arith.constant 1.000000e+00 : f32
    %9 = vector.broadcast %cst_6 : f32 to vector<32x512xf32>
    %10 = arith.addf %9, %8 : vector<32x512xf32>
    %11 = tpu.reciprocal %10 {approx = true} : vector<32x512xf32> -> vector<32x512xf32>
    %c32 = arith.constant 32 : index
    %c0_7 = arith.constant 0 : index
    %12 = vector.load %arg2[%c32, %c0_7] : memref<56x32xf32, #tpu.memory_space<vmem>>, vector<8x32xf32>
    %c32_8 = arith.constant 32 : index
    %c0_9 = arith.constant 0 : index
    %13 = vector.load %arg3[%c32_8, %c0_9] : memref<56x1xf32, #tpu.memory_space<vmem>>, vector<8x1xf32>
    %cst_10 = arith.constant dense<0.000000e+00> : vector<8x512xf32>
    %14 = tpu.matmul %12, %11, %cst_10 {dimension_numbers = #tpu.dot_dimension_numbers<[1], [0], [0], [1], [0, 0, 1, 1], [], []>} : vector<8x32xf32>, vector<32x512xf32>, vector<8x512xf32> -> vector<8x512xf32>
    %15 = vector.broadcast %13 : vector<8x1xf32> to vector<8x512xf32>
    %16 = arith.addf %14, %15 : vector<8x512xf32>
    %cst_11 = arith.constant 0.000000e+00 : f32
    %17 = vector.broadcast %cst_11 : f32 to vector<8x512xf32>
    %18 = arith.subf %17, %16 : vector<8x512xf32>
    %19 = math.exp %18 : vector<8x512xf32>
    %cst_12 = arith.constant 1.000000e+00 : f32
    %20 = vector.broadcast %cst_12 : f32 to vector<8x512xf32>
    %21 = arith.addf %20, %19 : vector<8x512xf32>
    %22 = tpu.reciprocal %21 {approx = true} : vector<8x512xf32> -> vector<8x512xf32>
    %c40 = arith.constant 40 : index
    %c0_13 = arith.constant 0 : index
    %23 = vector.load %arg2[%c40, %c0_13] : memref<56x32xf32, #tpu.memory_space<vmem>>, vector<4x8xf32>
    %c40_14 = arith.constant 40 : index
    %c0_15 = arith.constant 0 : index
    %24 = vector.load %arg3[%c40_14, %c0_15] : memref<56x1xf32, #tpu.memory_space<vmem>>, vector<4x1xf32>
    %cst_16 = arith.constant dense<0.000000e+00> : vector<4x512xf32>
    %25 = tpu.matmul %23, %22, %cst_16 {dimension_numbers = #tpu.dot_dimension_numbers<[1], [0], [0], [1], [0, 0, 1, 1], [], []>} : vector<4x8xf32>, vector<8x512xf32>, vector<4x512xf32> -> vector<4x512xf32>
    %26 = vector.broadcast %24 : vector<4x1xf32> to vector<4x512xf32>
    %27 = arith.addf %25, %26 : vector<4x512xf32>
    %cst_17 = arith.constant 0.000000e+00 : f32
    %28 = vector.broadcast %cst_17 : f32 to vector<4x512xf32>
    %29 = arith.subf %28, %27 : vector<4x512xf32>
    %30 = math.exp %29 : vector<4x512xf32>
    %cst_18 = arith.constant 1.000000e+00 : f32
    %31 = vector.broadcast %cst_18 : f32 to vector<4x512xf32>
    %32 = arith.addf %31, %30 : vector<4x512xf32>
    %33 = tpu.reciprocal %32 {approx = true} : vector<4x512xf32> -> vector<4x512xf32>
    %c48 = arith.constant 48 : index
    %c0_19 = arith.constant 0 : index
    %34 = vector.load %arg2[%c48, %c0_19] : memref<56x32xf32, #tpu.memory_space<vmem>>, vector<1x4xf32>
    %c48_20 = arith.constant 48 : index
    %c0_21 = arith.constant 0 : index
    %35 = vector.load %arg3[%c48_20, %c0_21] : memref<56x1xf32, #tpu.memory_space<vmem>>, vector<1x1xf32>
    %cst_22 = arith.constant dense<0.000000e+00> : vector<1x512xf32>
    %36 = tpu.matmul %34, %33, %cst_22 {dimension_numbers = #tpu.dot_dimension_numbers<[1], [0], [0], [1], [0, 0, 1, 1], [], []>} : vector<1x4xf32>, vector<4x512xf32>, vector<1x512xf32> -> vector<1x512xf32>
    %37 = vector.broadcast %35 : vector<1x1xf32> to vector<1x512xf32>
    %38 = arith.addf %36, %37 : vector<1x512xf32>
    %cst_23 = arith.constant 0.000000e+00 : f32
    %39 = vector.broadcast %cst_23 : f32 to vector<1x512xf32>
    %40 = arith.subf %39, %38 : vector<1x512xf32>
    %41 = math.exp %40 : vector<1x512xf32>
    %cst_24 = arith.constant 1.000000e+00 : f32
    %42 = vector.broadcast %cst_24 : f32 to vector<1x512xf32>
    %43 = arith.addf %42, %41 : vector<1x512xf32>
    %44 = tpu.reciprocal %43 {approx = true} : vector<1x512xf32> -> vector<1x512xf32>
    %c0_25 = arith.constant 0 : index
    %c0_26 = arith.constant 0 : index
    %45 = vector.load %arg4[%c0_25, %c0_26] : memref<1x512xf32, #tpu.memory_space<vmem>>, vector<1x512xf32>
    tpu.vector_store %arg4[%c0_25, %c0_26], %44 {strides = array<i32>} : memref<1x512xf32, #tpu.memory_space<vmem>>, vector<1x512xf32>,
    return
  }
  func.func @transform_0(%arg0: i32) -> (i32, i32) {
    %c0_i32 = arith.constant 0 : i32
    %c0_i32_0 = arith.constant 0 : i32
    return %c0_i32, %arg0 : i32, i32
  }
  func.func @transform_1(%arg0: i32) -> (i32, i32) {
    %c0_i32 = arith.constant 0 : i32
    %c0_i32_0 = arith.constant 0 : i32
    %c0_i32_1 = arith.constant 0 : i32
    return %c0_i32, %c0_i32_0 : i32, i32
  }
  func.func @transform_2(%arg0: i32) -> (i32, i32) {
    %c0_i32 = arith.constant 0 : i32
    %c0_i32_0 = arith.constant 0 : i32
    %c0_i32_1 = arith.constant 0 : i32
    return %c0_i32, %c0_i32_0 : i32, i32
  }
  func.func @transform_3(%arg0: i32) -> (i32, i32) {
    %c0_i32 = arith.constant 0 : i32
    %c0_i32_0 = arith.constant 0 : i32
    return %c0_i32, %arg0 : i32, i32
  }
}

</mosaic_0001>

<llo_original>
// kernel: dnn_forward.1
$region0: #{dnn_forward.1}
  #allocation0 [shape = 'u32[]', space=smem, size = 0x4, offset = 0x4, fixed_abs, tag = 'smem constant byte address 0x4 - core index']
  #allocation1 [shape = 'u32[144,128]{1,0:T(1,128)}', space=vmem, size = 0x12000, scoped, tag = 'internal scratch']
  %s0 = inlined_call_operand.vmem [shape: f32[8,1024], index: 0, kind: input, shape index: {}]
  %s1 = inlined_call_operand.vmem [shape: f32[56,32], index: 1, kind: input, shape index: {}]
  %s2 = inlined_call_operand.vmem [shape: f32[56,1], index: 2, kind: input, shape index: {}]
  %s3 = inlined_call_operand.vmem [shape: f32[1,1024], index: 3, kind: output, shape index: {}]
  %s4 = sld [smem:[#allocation0]]
  $region45: #{dnn_forward.1} parent=0
    _
  %s6 = ssub.s32 1, %s4
  %s7 = scalar_select 0, %s6, %s4
  loop: start=0, step=1, limit=4
  $region2: #{dnn_forward.1} parent=0 // loop_pre_header
    _
  $region3: #{dnn_forward.1} parent=0 // loop_header
    %s9 = sphi 0, %s13
    %p10 = scmp.ge.s32.totalorder %s9, 4
    %s19 = sphi 0, %s21
    %s22 = sphi 0, %s19
    %s23 = sphi 0, %s22
    %s39 = sphi 0, %s23
    %s43 = sphi 0, %s43
    %s45 = sphi 0, %s43
    %s46 = sphi 0, %s45
    %s60 = sphi 0, %s46
    %s64 = sphi 0, %s64
    %s66 = sphi 0, %s64
    %s67 = sphi 0, %s66
    %s81 = sphi 0, %s67
    %s87 = sphi 0, %s89
    %s90 = sphi 0, %s87
    %s91 = sphi 0, %s90
    %s107 = sphi 0, %s91
  $region4: #{dnn_forward.1} parent=0 // loop_header_branch
    %12 = sbr.rel (%p10) target = $region8
  $region5: #{dnn_forward.1} parent=0 // loop_body
    %s14 = ssub.s32 %s9, 1
    %s15 = ssub.s32 %s9, 2
    %s16 = sadd.s32 %s9, 1
    %s17 = ssub.s32 %s9, %s16
    %p18 = scmp.eq.s32.totalorder %s17, 0
    %s20 = sadd.s32 %s19, 1
    %s21 = scalar_select %p18, %s19, %s20
    %p24 = pneg %p18
    %p25 = scmp.eq.s32.totalorder %s9, 1
    %p26 = por %p24, %p25
    %p27 = scmp.ne.s32.totalorder %s19, %s22
    %p28 = scmp.eq.s32.totalorder %s9, 0
    %p29 = por %p27, %p28
    %p30 = scmp.ne.s32.totalorder %s19, %s22
    %p31 = scmp.eq.s32.totalorder %s14, 1
    %p32 = por %p30, %p31
    %p33 = scmp.ne.s32.totalorder %s22, %s23
    %p34 = scmp.eq.s32.totalorder %s14, 0
    %p35 = por %p33, %p34
    %p36 = scmp.ne.s32.totalorder %s22, %s23
    %p37 = scmp.eq.s32.totalorder %s15, 1
    %p38 = por %p36, %p37
    %p40 = scmp.ne.s32.totalorder %s23, %s39
    %p41 = scmp.eq.s32.totalorder %s15, 0
    %p42 = por %p40, %p41
    %s44 = sadd.s32 %s43, 1
    %p47 = scmp.eq.s32.totalorder %s9, 1
    %p48 = scmp.ne.s32.totalorder %s43, %s45
    %p49 = scmp.eq.s32.totalorder %s9, 0
    %p50 = por %p48, %p49
    %p51 = scmp.ne.s32.totalorder %s43, %s45
    %p52 = scmp.eq.s32.totalorder %s14, 1
    %p53 = por %p51, %p52
    %p54 = scmp.ne.s32.totalorder %s45, %s46
    %p55 = scmp.eq.s32.totalorder %s14, 0
    %p56 = por %p54, %p55
    %p57 = scmp.ne.s32.totalorder %s45, %s46
    %p58 = scmp.eq.s32.totalorder %s15, 1
    %p59 = por %p57, %p58
    %p61 = scmp.ne.s32.totalorder %s46, %s60
    %p62 = scmp.eq.s32.totalorder %s15, 0
    %p63 = por %p61, %p62
    %s65 = sadd.s32 %s64, 1
    %p68 = scmp.eq.s32.totalorder %s9, 1
    %p69 = scmp.ne.s32.totalorder %s64, %s66
    %p70 = scmp.eq.s32.totalorder %s9, 0
    %p71 = por %p69, %p70
    %p72 = scmp.ne.s32.totalorder %s64, %s66
    %p73 = scmp.eq.s32.totalorder %s14, 1
    %p74 = por %p72, %p73
    %p75 = scmp.ne.s32.totalorder %s66, %s67
    %p76 = scmp.eq.s32.totalorder %s14, 0
    %p77 = por %p75, %p76
    %p78 = scmp.ne.s32.totalorder %s66, %s67
    %p79 = scmp.eq.s32.totalorder %s15, 1
    %p80 = por %p78, %p79
    %p82 = scmp.ne.s32.totalorder %s67, %s81
    %p83 = scmp.eq.s32.totalorder %s15, 0
    %p84 = por %p82, %p83
    %s85 = ssub.s32 %s9, %s16
    %p86 = scmp.eq.s32.totalorder %s85, 0
    %s88 = sadd.s32 %s87, 1
    %s89 = scalar_select %p86, %s87, %s88
    %p92 = pneg %p86
    %p93 = scmp.eq.s32.totalorder %s9, 1
    %p94 = por %p92, %p93
    %p95 = scmp.ne.s32.totalorder %s87, %s90
    %p96 = scmp.eq.s32.totalorder %s9, 0
    %p97 = por %p95, %p96
    %p98 = scmp.ne.s32.totalorder %s87, %s90
    %p99 = scmp.eq.s32.totalorder %s14, 1
    %p100 = por %p98, %p99
    %p101 = scmp.ne.s32.totalorder %s90, %s91
    %p102 = scmp.eq.s32.totalorder %s14, 0
    %p103 = por %p101, %p102
    %p104 = scmp.ne.s32.totalorder %s90, %s91
    %p105 = scmp.eq.s32.totalorder %s15, 1
    %p106 = por %p104, %p105
    %p108 = scmp.ne.s32.totalorder %s91, %s107
    %p109 = scmp.eq.s32.totalorder %s15, 0
    %p110 = por %p108, %p109
    %p111 = scmp.le.s32.totalorder 1, %s9
    %p112 = scmp.lt.s32.totalorder %s9, 3
    %p113 = pnand %p111, %p112
    %p114 = pneg %p113
    // Predicated region
    $region9: #{dnn_forward.1} parent=5 // pred_check
      _
    $region10: #{dnn_forward.1} parent=5 // pred_check_branch
      %116 = sbr.rel (%p113) target = $region12
    $region11: #{dnn_forward.1} parent=5 // pred_region
      %s117 = ssub.s32 %s9, 1
      // Predicated region
      $region13: #{dnn_forward.1} parent=11 // pred_check
        %p118 = pneg %p56
      $region14: #{dnn_forward.1} parent=11 // pred_check_branch
        %120 = sbr.rel (%p118) target = $region16
      $region15: #{dnn_forward.1} parent=11 // pred_region
        _
      $region16: #{dnn_forward.1} parent=11 // pred_fallthru
        _
      // Predicated region
      $region17: #{dnn_forward.1} parent=11 // pred_check
        %p121 = pneg %p77
      $region18: #{dnn_forward.1} parent=11 // pred_check_branch
        %123 = sbr.rel (%p121) target = $region20
      $region19: #{dnn_forward.1} parent=11 // pred_region
        _
      $region20: #{dnn_forward.1} parent=11 // pred_fallthru
        _
    $region12: #{dnn_forward.1} parent=5 // pred_fallthru
      _
    %p124 = scmp.lt.s32.totalorder %s9, 2
    // Predicated region
    $region21: #{dnn_forward.1} parent=5 // pred_check
      %p125 = pneg %p124
    $region22: #{dnn_forward.1} parent=5 // pred_check_branch
      %127 = sbr.rel (%p125) target = $region24
    $region23: #{dnn_forward.1} parent=5 // pred_region
      // Predicated region
      $region25: #{dnn_forward.1} parent=23 // pred_check
        %p128 = pneg %p29
      $region26: #{dnn_forward.1} parent=23 // pred_check_branch
        %130 = sbr.rel (%p128) target = $region28
      $region27: #{dnn_forward.1} parent=23 // pred_region
        %s131 = smul.u32 4, %s9
        %p132 = scmp.lt.s32.totalorder %s131, 7
        %s133 = scalar_select %p132, %s131, 7
        %s134 = smul.addr %s133, 8
        %s135 = scalar_lea.vmem %s0, %s134
        %s136 = smul.u32 4, %s9
      $region28: #{dnn_forward.1} parent=23 // pred_fallthru
        _
    $region24: #{dnn_forward.1} parent=5 // pred_fallthru
      _
    %p137 = scmp.le.s32.totalorder 1, %s9
    %p138 = scmp.lt.s32.totalorder %s9, 3
    %p139 = pnand %p137, %p138
    %p140 = pneg %p139
    // Predicated region
    $region29: #{dnn_forward.1} parent=5 // pred_check
      _
    $region30: #{dnn_forward.1} parent=5 // pred_check_branch
      %142 = sbr.rel (%p139) target = $region32
    $region31: #{dnn_forward.1} parent=5 // pred_region
      %s143 = ssub.s32 %s9, 1
      %s144 = smul.u32 4, %s14
      %p145 = scmp.lt.s32.totalorder %s144, 7
      %s146 = scalar_select %p145, %s144, 7
      %s147 = smul.addr %s146, 8
      %s148 = scalar_lea.vmem %s0, %s147
      %p149 = pneg %p35
      %p150 = pneg %p32
      %p151 = pneg %p56
      %p152 = pneg %p53
      %p153 = pneg %p77
      %p154 = pneg %p74
      %p155 = pneg %p103
      %p156 = pneg %p100
      %s157 = smul.u32 4, %s14
      %p158 = scmp.lt.s32.totalorder %s157, 7
      %s159 = scalar_select %p158, %s157, 7
      %s160 = scalar_lea.vmem %s3, %s159
      %s161 = smul.u32 4, %s14
      %p162 = scmp.lt.s32.totalorder %s161, 7
      %s163 = scalar_select %p162, %s161, 7
      %s164 = smul.addr %s163, 8
      %s165 = scalar_lea.vmem %s0, %s164
      %s166 = smul.u32 4, %s14
      %s167 = smul.u32 4, %s14
      %p168 = scmp.lt.s32.totalorder %s167, 7
      %s169 = scalar_select %p168, %s167, 7
      %s170 = scalar_lea.vmem %s3, %s169
      %s171 = smul.u32 4, %s14
      %v172 = vld [vmem:[%s165] sm:$0xff]
      %v173 = vld [vmem:[%s165 + $0x8] sm:$0xff]
      %v174 = vld [vmem:[%s165 + $0x10] sm:$0xff]
      %v175 = vld [vmem:[%s165 + $0x18] sm:$0xff]
      %v176 = vld [vmem:[%s1] sm:$0xff]
      %v177 = vld [vmem:[%s1 + $0x8] sm:$0xff]
      %v178 = vld [vmem:[%s1 + $0x10] sm:$0xff]
      %v179 = vld [vmem:[%s1 + $0x18] sm:$0xff]
      %v180 = vld [vmem:[%s2] sm:$0xff]
      %v181 = vld [vmem:[%s2 + $0x8] sm:$0xff]
      %v182 = vld [vmem:[%s2 + $0x10] sm:$0xff]
      %v183 = vld [vmem:[%s2 + $0x18] sm:$0xff]
      %185 = vset.pattern.permute.xlu0 0
      %186 = vperm.xlu0 %185, %v180
      %v187 = vpop.permute.xlu0 %186
      %190 = vset.pattern.permute.xlu0 0
      %191 = vperm.xlu0 %190, %v181
      %v192 = vpop.permute.xlu0 %191
      %195 = vset.pattern.permute.xlu0 0
      %196 = vperm.xlu0 %195, %v182
      %v197 = vpop.permute.xlu0 %196
      %200 = vset.pattern.permute.xlu0 0
      %201 = vperm.xlu0 %200, %v183
      %v202 = vpop.permute.xlu0 %201
      %vm204 = vcmask 64512
      %v206 = vsel %vm204, %v176, 0
      %v209 = vsel %vm204, %v177, 0
      %v212 = vsel %vm204, %v178, 0
      %v215 = vsel %vm204, %v179, 0
      %217 = vmatprep.subr.mxu0 %v173
      %218 = vmatpush1.msra.mxu0 %v172
      %219 = vmatprep.subr.mxu0 0.0
      %220 = vmatpush1.msra.mxu0 0.0
      %221 = vmatprep.subr.mxu0 0.0
      %222 = vmatpush1.msra.mxu0 0.0
      %223 = vmatprep.subr.mxu0 0.0
      %224 = vmatpush1.msra.mxu0 0.0
      %225 = vmatprep.subr.mxu0 0.0
      %226 = vmatpush1.msra.mxu0 0.0
      %227 = vmatprep.subr.mxu0 0.0
      %228 = vmatpush1.msra.mxu0 0.0
      %229 = vmatprep.subr.mxu0 0.0
      %230 = vmatpush1.msra.mxu0 0.0
      %231 = vmatprep.subr.mxu0 0.0
      %232 = vmatpush1.msra.mxu0 0.0
      %233 = vmatprep.subr.mxu0 0.0
      %234 = vmatpush1.msra.mxu0 0.0
      %235 = vmatprep.subr.mxu0 0.0
      %236 = vmatpush1.msra.mxu0 0.0
      %237 = vmatprep.subr.mxu0 0.0
      %238 = vmatpush1.msra.mxu0 0.0
      %239 = vmatprep.subr.mxu0 0.0
      %240 = vmatpush1.msra.mxu0 0.0
      %241 = vmatprep.subr.mxu0 0.0
      %242 = vmatpush1.msra.mxu0 0.0
      %243 = vmatprep.subr.mxu0 0.0
      %244 = vmatpush1.msra.mxu0 0.0
      %245 = vmatprep.subr.mxu0 0.0
      %246 = vmatpush1.msra.mxu0 0.0
      %247 = vmatprep.subr.mxu0 0.0
      %248 = vmatpush1.msra.mxu0 0.0
      %249 = vmatprep.subr.mxu0 0.0
      %250 = vmatpush1.msra.mxu0 0.0
      %251 = vmatprep.subr.mxu0 0.0
      %252 = vmatpush1.msra.mxu0 0.0
      %253 = vmatprep.subr.mxu0 0.0
      %254 = vmatpush1.msra.mxu0 0.0
      %255 = vmatprep.subr.mxu0 0.0
      %256 = vmatpush1.msra.mxu0 0.0
      %257 = vmatprep.subr.mxu0 0.0
      %258 = vmatpush1.msra.mxu0 0.0
      %259 = vmatprep.subr.mxu0 0.0
      %260 = vmatpush1.msra.mxu0 0.0
      %261 = vmatprep.subr.mxu0 0.0
      %262 = vmatpush1.msra.mxu0 0.0
      %263 = vmatprep.subr.mxu0 0.0
      %264 = vmatpush1.msra.mxu0 0.0
      %265 = vmatprep.subr.mxu0 0.0
      %266 = vmatpush1.msra.mxu0 0.0
      %267 = vmatprep.subr.mxu0 0.0
      %268 = vmatpush1.msra.mxu0 0.0
      %269 = vmatprep.subr.mxu0 0.0
      %270 = vmatpush1.msra.mxu0 0.0
      %271 = vmatprep.subr.mxu0 0.0
      %272 = vmatpush1.msra.mxu0 0.0
      %273 = vmatprep.subr.mxu0 0.0
      %274 = vmatpush1.msra.mxu0 0.0
      %275 = vmatprep.subr.mxu0 0.0
      %276 = vmatpush1.msra.mxu0 0.0
      %277 = vmatprep.subr.mxu0 0.0
      %278 = vmatpush1.msra.mxu0 0.0
      %279 = vmatprep.subr.mxu0 0.0
      %280 = vmatpush1.msra.mxu0 0.0
      %281 = vmatprep.mubr.f32.mxu0 0.0
      %282 = vmatmul.mubr.f32.gmra.mrb[0].mxu0 %v206
      %v283 = vpop.f32.mrb[0].mxu0
      %v284 = vadd.f32 %v187, %v283
      %v285 = vpop.f32.mrb[0].mxu0
      %v286 = vadd.f32 %v187, %v285
      %287 = vmatprep.mubr.f32.mxu0 0.0
      %288 = vmatmul.mubr.f32.gmra.mrb[0].mxu0 %v209
      %v289 = vpop.f32.mrb[0].mxu0
      %v290 = vadd.f32 %v192, %v289
      %v291 = vpop.f32.mrb[0].mxu0
      %v292 = vadd.f32 %v192, %v291
      %293 = vmatprep.mubr.f32.mxu0 0.0
      %294 = vmatmul.mubr.f32.gmra.mrb[0].mxu0 %v212
      %v295 = vpop.f32.mrb[0].mxu0
      %v296 = vadd.f32 %v197, %v295
      %v297 = vpop.f32.mrb[0].mxu0
      %v298 = vadd.f32 %v197, %v297
      %299 = vmatprep.mubr.f32.mxu0 0.0
      %300 = vmatmul.mubr.f32.gmra.mrb[0].mxu0 %v215
      %v301 = vpop.f32.mrb[0].mxu0
      %v302 = vadd.f32 %v202, %v301
      %v303 = vpop.f32.mrb[0].mxu0
      %v304 = vadd.f32 %v202, %v303
      %305 = vdwg.mxu0
      %306 = vmatprep.subr.mxu0 %v175
      %307 = vmatpush1.msra.mxu0 %v174
      %308 = vmatprep.subr.mxu0 0.0
      %309 = vmatpush1.msra.mxu0 0.0
      %310 = vmatprep.subr.mxu0 0.0
      %311 = vmatpush1.msra.mxu0 0.0
      %312 = vmatprep.subr.mxu0 0.0
      %313 = vmatpush1.msra.mxu0 0.0
      %314 = vmatprep.subr.mxu0 0.0
      %315 = vmatpush1.msra.mxu0 0.0
      %316 = vmatprep.subr.mxu0 0.0
      %317 = vmatpush1.msra.mxu0 0.0
      %318 = vmatprep.subr.mxu0 0.0
      %319 = vmatpush1.msra.mxu0 0.0
      %320 = vmatprep.subr.mxu0 0.0
      %321 = vmatpush1.msra.mxu0 0.0
      %322 = vmatprep.subr.mxu0 0.0
      %323 = vmatpush1.msra.mxu0 0.0
      %324 = vmatprep.subr.mxu0 0.0
      %325 = vmatpush1.msra.mxu0 0.0
      %326 = vmatprep.subr.mxu0 0.0
      %327 = vmatpush1.msra.mxu0 0.0
      %328 = vmatprep.subr.mxu0 0.0
      %329 = vmatpush1.msra.mxu0 0.0
      %330 = vmatprep.subr.mxu0 0.0
      %331 = vmatpush1.msra.mxu0 0.0
      %332 = vmatprep.subr.mxu0 0.0
      %333 = vmatpush1.msra.mxu0 0.0
      %334 = vmatprep.subr.mxu0 0.0
      %335 = vmatpush1.msra.mxu0 0.0
      %336 = vmatprep.subr.mxu0 0.0
      %337 = vmatpush1.msra.mxu0 0.0
      %338 = vmatprep.subr.mxu0 0.0
      %339 = vmatpush1.msra.mxu0 0.0
      %340 = vmatprep.subr.mxu0 0.0
      %341 = vmatpush1.msra.mxu0 0.0
      %342 = vmatprep.subr.mxu0 0.0
      %343 = vmatpush1.msra.mxu0 0.0
      %344 = vmatprep.subr.mxu0 0.0
      %345 = vmatpush1.msra.mxu0 0.0
      %346 = vmatprep.subr.mxu0 0.0
      %347 = vmatpush1.msra.mxu0 0.0
      %348 = vmatprep.subr.mxu0 0.0
      %349 = vmatpush1.msra.mxu0 0.0
      %350 = vmatprep.subr.mxu0 0.0
      %351 = vmatpush1.msra.mxu0 0.0
      %352 = vmatprep.subr.mxu0 0.0
      %353 = vmatpush1.msra.mxu0 0.0
      %354 = vmatprep.subr.mxu0 0.0
      %355 = vmatpush1.msra.mxu0 0.0
      %356 = vmatprep.subr.mxu0 0.0
      %357 = vmatpush1.msra.mxu0 0.0
      %358 = vmatprep.subr.mxu0 0.0
      %359 = vmatpush1.msra.mxu0 0.0
      %360 = vmatprep.subr.mxu0 0.0
      %361 = vmatpush1.msra.mxu0 0.0
      %362 = vmatprep.subr.mxu0 0.0
      %363 = vmatpush1.msra.mxu0 0.0
      %364 = vmatprep.subr.mxu0 0.0
      %365 = vmatpush1.msra.mxu0 0.0
      %366 = vmatprep.subr.mxu0 0.0
      %367 = vmatpush1.msra.mxu0 0.0
      %368 = vmatprep.subr.mxu0 0.0
      %369 = vmatpush1.msra.mxu0 0.0
      %370 = vmatprep.mubr.f32.mxu0 0.0
      %371 = vmatmul.mubr.f32.gmra.mrb[0].mxu0 %v206
      %v372 = vpop.f32.mrb[0].mxu0
      %v373 = vadd.f32 %v187, %v372
      %v374 = vpop.f32.mrb[0].mxu0
      %v375 = vadd.f32 %v187, %v374
      %376 = vmatprep.mubr.f32.mxu0 0.0
      %377 = vmatmul.mubr.f32.gmra.mrb[0].mxu0 %v209
      %v378 = vpop.f32.mrb[0].mxu0
      %v379 = vadd.f32 %v192, %v378
      %v380 = vpop.f32.mrb[0].mxu0
      %v381 = vadd.f32 %v192, %v380
      %382 = vmatprep.mubr.f32.mxu0 0.0
      %383 = vmatmul.mubr.f32.gmra.mrb[0].mxu0 %v212
      %v384 = vpop.f32.mrb[0].mxu0
      %v385 = vadd.f32 %v197, %v384
      %v386 = vpop.f32.mrb[0].mxu0
      %v387 = vadd.f32 %v197, %v386
      %388 = vmatprep.mubr.f32.mxu0 0.0
      %389 = vmatmul.mubr.f32.gmra.mrb[0].mxu0 %v215
      %v390 = vpop.f32.mrb[0].mxu0
      %v391 = vadd.f32 %v202, %v390
      %v392 = vpop.f32.mrb[0].mxu0
      %v393 = vadd.f32 %v202, %v392
      %394 = vdwg.mxu0
      %v395 = vsub.f32 0.0, %v284
      %v396 = vsub.f32 0.0, %v286
      %v397 = vsub.f32 0.0, %v373
      %v398 = vsub.f32 0.0, %v375
      %v399 = vsub.f32 0.0, %v290
      %v400 = vsub.f32 0.0, %v292
      %v401 = vsub.f32 0.0, %v379
      %v402 = vsub.f32 0.0, %v381
      %v403 = vsub.f32 0.0, %v296
      %v404 = vsub.f32 0.0, %v298
      %v405 = vsub.f32 0.0, %v385
      %v406 = vsub.f32 0.0, %v387
      %v407 = vsub.f32 0.0, %v302
      %v408 = vsub.f32 0.0, %v304
      %v409 = vsub.f32 0.0, %v391
      %v410 = vsub.f32 0.0, %v393
      %v411 = vmul.f32 %v395, 1.442695
      %v412 = vpow.pop %v411
      %v413 = vmul.f32 %v396, 1.442695
      %v414 = vpow.pop %v413
      %v415 = vmul.f32 %v397, 1.442695
      %v416 = vpow.pop %v415
      %v417 = vmul.f32 %v398, 1.442695
      %v418 = vpow.pop %v417
      %v419 = vmul.f32 %v399, 1.442695
      %v420 = vpow.pop %v419
      %v421 = vmul.f32 %v400, 1.442695
      %v422 = vpow.pop %v421
      %v423 = vmul.f32 %v401, 1.442695
      %v424 = vpow.pop %v423
      %v425 = vmul.f32 %v402, 1.442695
      %v426 = vpow.pop %v425
      %v427 = vmul.f32 %v403, 1.442695
      %v428 = vpow.pop %v427
      %v429 = vmul.f32 %v404, 1.442695
      %v430 = vpow.pop %v429
      %v431 = vmul.f32 %v405, 1.442695
      %v432 = vpow.pop %v431
      %v433 = vmul.f32 %v406, 1.442695
      %v434 = vpow.pop %v433
      %v435 = vmul.f32 %v407, 1.442695
      %v436 = vpow.pop %v435
      %v437 = vmul.f32 %v408, 1.442695
      %v438 = vpow.pop %v437
      %v439 = vmul.f32 %v409, 1.442695
      %v440 = vpow.pop %v439
      %v441 = vmul.f32 %v410, 1.442695
      %v442 = vpow.pop %v441
      %v443 = vadd.f32 %v412, 1.0
      %v444 = vadd.f32 %v414, 1.0
      %v445 = vadd.f32 %v416, 1.0
      %v446 = vadd.f32 %v418, 1.0
      %v447 = vadd.f32 %v420, 1.0
      %v448 = vadd.f32 %v422, 1.0
      %v449 = vadd.f32 %v424, 1.0
      %v450 = vadd.f32 %v426, 1.0
      %v451 = vadd.f32 %v428, 1.0
      %v452 = vadd.f32 %v430, 1.0
      %v453 = vadd.f32 %v432, 1.0
      %v454 = vadd.f32 %v434, 1.0
      %v455 = vadd.f32 %v436, 1.0
      %v456 = vadd.f32 %v438, 1.0
      %v457 = vadd.f32 %v440, 1.0
      %v458 = vadd.f32 %v442, 1.0
      %v459 = vrcp.pop %v443
      %v460 = vrcp.pop %v444
      %v461 = vrcp.pop %v445
      %v462 = vrcp.pop %v446
      %v463 = vrcp.pop %v447
      %v464 = vrcp.pop %v448
      %v465 = vrcp.pop %v449
      %v466 = vrcp.pop %v450
      %v467 = vrcp.pop %v451
      %v468 = vrcp.pop %v452
      %v469 = vrcp.pop %v453
      %v470 = vrcp.pop %v454
      %v471 = vrcp.pop %v455
      %v472 = vrcp.pop %v456
      %v473 = vrcp.pop %v457
      %v474 = vrcp.pop %v458
      %v475 = vld [vmem:[%s1 + $0x20] sm:$0xff]
      %v476 = vld [vmem:[%s2 + $0x20] sm:$0xff]
      %478 = vset.pattern.permute.xlu0 0
      %479 = vperm.xlu0 %478, %v476
      %v480 = vpop.permute.xlu0 %479
      %vm482 = vcmask 261120
      %v484 = vsel %vm482, %v475, 0
      %486 = vmatprep.subr.mxu0 %v460
      %487 = vmatpush1.msra.mxu0 %v459
      %488 = vmatprep.subr.mxu0 %v464
      %489 = vmatpush1.msra.mxu0 %v463
      %490 = vmatprep.subr.mxu0 %v468
      %491 = vmatpush1.msra.mxu0 %v467
      %492 = vmatprep.subr.mxu0 %v472
      %493 = vmatpush1.msra.mxu0 %v471
      %494 = vmatprep.subr.mxu0 0.0
      %495 = vmatpush1.msra.mxu0 0.0
      %496 = vmatprep.subr.mxu0 0.0
      %497 = vmatpush1.msra.mxu0 0.0
      %498 = vmatprep.subr.mxu0 0.0
      %499 = vmatpush1.msra.mxu0 0.0
      %500 = vmatprep.subr.mxu0 0.0
      %501 = vmatpush1.msra.mxu0 0.0
      %502 = vmatprep.subr.mxu0 0.0
      %503 = vmatpush1.msra.mxu0 0.0
      %504 = vmatprep.subr.mxu0 0.0
      %505 = vmatpush1.msra.mxu0 0.0
      %506 = vmatprep.subr.mxu0 0.0
      %507 = vmatpush1.msra.mxu0 0.0
      %508 = vmatprep.subr.mxu0 0.0
      %509 = vmatpush1.msra.mxu0 0.0
      %510 = vmatprep.subr.mxu0 0.0
      %511 = vmatpush1.msra.mxu0 0.0
      %512 = vmatprep.subr.mxu0 0.0
      %513 = vmatpush1.msra.mxu0 0.0
      %514 = vmatprep.subr.mxu0 0.0
      %515 = vmatpush1.msra.mxu0 0.0
      %516 = vmatprep.subr.mxu0 0.0
      %517 = vmatpush1.msra.mxu0 0.0
      %518 = vmatprep.subr.mxu0 0.0
      %519 = vmatpush1.msra.mxu0 0.0
      %520 = vmatprep.subr.mxu0 0.0
      %521 = vmatpush1.msra.mxu0 0.0
      %522 = vmatprep.subr.mxu0 0.0
      %523 = vmatpush1.msra.mxu0 0.0
      %524 = vmatprep.subr.mxu0 0.0
      %525 = vmatpush1.msra.mxu0 0.0
      %526 = vmatprep.subr.mxu0 0.0
      %527 = vmatpush1.msra.mxu0 0.0
      %528 = vmatprep.subr.mxu0 0.0
      %529 = vmatpush1.msra.mxu0 0.0
      %530 = vmatprep.subr.mxu0 0.0
      %531 = vmatpush1.msra.mxu0 0.0
      %532 = vmatprep.subr.mxu0 0.0
      %533 = vmatpush1.msra.mxu0 0.0
      %534 = vmatprep.subr.mxu0 0.0
      %535 = vmatpush1.msra.mxu0 0.0
      %536 = vmatprep.subr.mxu0 0.0
      %537 = vmatpush1.msra.mxu0 0.0
      %538 = vmatprep.subr.mxu0 0.0
      %539 = vmatpush1.msra.mxu0 0.0
      %540 = vmatprep.subr.mxu0 0.0
      %541 = vmatpush1.msra.mxu0 0.0
      %542 = vmatprep.subr.mxu0 0.0
      %543 = vmatpush1.msra.mxu0 0.0
      %544 = vmatprep.subr.mxu0 0.0
      %545 = vmatpush1.msra.mxu0 0.0
      %546 = vmatprep.subr.mxu0 0.0
      %547 = vmatpush1.msra.mxu0 0.0
      %548 = vmatprep.subr.mxu0 0.0
      %549 = vmatpush1.msra.mxu0 0.0
      %550 = vmatprep.mubr.f32.mxu0 0.0
      %551 = vmatmul.mubr.f32.gmra.mrb[0].mxu0 %v484
      %v552 = vpop.f32.mrb[0].mxu0
      %v553 = vadd.f32 %v480, %v552
      %v554 = vpop.f32.mrb[0].mxu0
      %v555 = vadd.f32 %v480, %v554
      %556 = vdwg.mxu0
      %557 = vmatprep.subr.mxu0 %v462
      %558 = vmatpush1.msra.mxu0 %v461
      %559 = vmatprep.subr.mxu0 %v466
      %560 = vmatpush1.msra.mxu0 %v465
      %561 = vmatprep.subr.mxu0 %v470
      %562 = vmatpush1.msra.mxu0 %v469
      %563 = vmatprep.subr.mxu0 %v474
      %564 = vmatpush1.msra.mxu0 %v473
      %565 = vmatprep.subr.mxu0 0.0
      %566 = vmatpush1.msra.mxu0 0.0
      %567 = vmatprep.subr.mxu0 0.0
      %568 = vmatpush1.msra.mxu0 0.0
      %569 = vmatprep.subr.mxu0 0.0
      %570 = vmatpush1.msra.mxu0 0.0
      %571 = vmatprep.subr.mxu0 0.0
      %572 = vmatpush1.msra.mxu0 0.0
      %573 = vmatprep.subr.mxu0 0.0
      %574 = vmatpush1.msra.mxu0 0.0
      %575 = vmatprep.subr.mxu0 0.0
      %576 = vmatpush1.msra.mxu0 0.0
      %577 = vmatprep.subr.mxu0 0.0
      %578 = vmatpush1.msra.mxu0 0.0
      %579 = vmatprep.subr.mxu0 0.0
      %580 = vmatpush1.msra.mxu0 0.0
      %581 = vmatprep.subr.mxu0 0.0
      %582 = vmatpush1.msra.mxu0 0.0
      %583 = vmatprep.subr.mxu0 0.0
      %584 = vmatpush1.msra.mxu0 0.0
      %585 = vmatprep.subr.mxu0 0.0
      %586 = vmatpush1.msra.mxu0 0.0
      %587 = vmatprep.subr.mxu0 0.0
      %588 = vmatpush1.msra.mxu0 0.0
      %589 = vmatprep.subr.mxu0 0.0
      %590 = vmatpush1.msra.mxu0 0.0
      %591 = vmatprep.subr.mxu0 0.0
      %592 = vmatpush1.msra.mxu0 0.0
      %593 = vmatprep.subr.mxu0 0.0
      %594 = vmatpush1.msra.mxu0 0.0
      %595 = vmatprep.subr.mxu0 0.0
      %596 = vmatpush1.msra.mxu0 0.0
      %597 = vmatprep.subr.mxu0 0.0
      %598 = vmatpush1.msra.mxu0 0.0
      %599 = vmatprep.subr.mxu0 0.0
      %600 = vmatpush1.msra.mxu0 0.0
      %601 = vmatprep.subr.mxu0 0.0
      %602 = vmatpush1.msra.mxu0 0.0
      %603 = vmatprep.subr.mxu0 0.0
      %604 = vmatpush1.msra.mxu0 0.0
      %605 = vmatprep.subr.mxu0 0.0
      %606 = vmatpush1.msra.mxu0 0.0
      %607 = vmatprep.subr.mxu0 0.0
      %608 = vmatpush1.msra.mxu0 0.0
      %609 = vmatprep.subr.mxu0 0.0
      %610 = vmatpush1.msra.mxu0 0.0
      %611 = vmatprep.subr.mxu0 0.0
      %612 = vmatpush1.msra.mxu0 0.0
      %613 = vmatprep.subr.mxu0 0.0
      %614 = vmatpush1.msra.mxu0 0.0
      %615 = vmatprep.subr.mxu0 0.0
      %616 = vmatpush1.msra.mxu0 0.0
      %617 = vmatprep.subr.mxu0 0.0
      %618 = vmatpush1.msra.mxu0 0.0
      %619 = vmatprep.subr.mxu0 0.0
      %620 = vmatpush1.msra.mxu0 0.0
      %621 = vmatprep.mubr.f32.mxu0 0.0
      %622 = vmatmul.mubr.f32.gmra.mrb[0].mxu0 %v484
      %v623 = vpop.f32.mrb[0].mxu0
      %v624 = vadd.f32 %v480, %v623
      %v625 = vpop.f32.mrb[0].mxu0
      %v626 = vadd.f32 %v480, %v625
      %627 = vdwg.mxu0
      %v628 = vsub.f32 0.0, %v553
      %v629 = vsub.f32 0.0, %v555
      %v630 = vsub.f32 0.0, %v624
      %v631 = vsub.f32 0.0, %v626
      %v632 = vmul.f32 %v628, 1.442695
      %v633 = vpow.pop %v632
      %v634 = vmul.f32 %v629, 1.442695
      %v635 = vpow.pop %v634
      %v636 = vmul.f32 %v630, 1.442695
      %v637 = vpow.pop %v636
      %v638 = vmul.f32 %v631, 1.442695
      %v639 = vpow.pop %v638
      %v640 = vadd.f32 %v633, 1.0
      %v641 = vadd.f32 %v635, 1.0
      %v642 = vadd.f32 %v637, 1.0
      %v643 = vadd.f32 %v639, 1.0
      %v644 = vrcp.pop %v640
      %v645 = vrcp.pop %v641
      %v646 = vrcp.pop %v642
      %v647 = vrcp.pop %v643
      %v648 = vld [vmem:[%s1 + $0x28] sm:$0xf]
      %v649 = vld [vmem:[%s2 + $0x28] sm:$0xf]
      %651 = vset.pattern.permute.xlu0 0
      %652 = vperm.xlu0 %651, %v649
      %v653 = vpop.permute.xlu0 %652
      %v656 = vsel %vm204, %v648, 0
      %658 = vmatprep.subr.mxu0 %v645
      %659 = vmatpush1.msra.mxu0 %v644
      %660 = vmatprep.subr.mxu0 0.0
      %661 = vmatpush1.msra.mxu0 0.0
      %662 = vmatprep.subr.mxu0 0.0
      %663 = vmatpush1.msra.mxu0 0.0
      %664 = vmatprep.subr.mxu0 0.0
      %665 = vmatpush1.msra.mxu0 0.0
      %666 = vmatprep.subr.mxu0 0.0
      %667 = vmatpush1.msra.mxu0 0.0
      %668 = vmatprep.subr.mxu0 0.0
      %669 = vmatpush1.msra.mxu0 0.0
      %670 = vmatprep.subr.mxu0 0.0
      %671 = vmatpush1.msra.mxu0 0.0
      %672 = vmatprep.subr.mxu0 0.0
      %673 = vmatpush1.msra.mxu0 0.0
      %674 = vmatprep.subr.mxu0 0.0
      %675 = vmatpush1.msra.mxu0 0.0
      %676 = vmatprep.subr.mxu0 0.0
      %677 = vmatpush1.msra.mxu0 0.0
      %678 = vmatprep.subr.mxu0 0.0
      %679 = vmatpush1.msra.mxu0 0.0
      %680 = vmatprep.subr.mxu0 0.0
      %681 = vmatpush1.msra.mxu0 0.0
      %682 = vmatprep.subr.mxu0 0.0
      %683 = vmatpush1.msra.mxu0 0.0
      %684 = vmatprep.subr.mxu0 0.0
      %685 = vmatpush1.msra.mxu0 0.0
      %686 = vmatprep.subr.mxu0 0.0
      %687 = vmatpush1.msra.mxu0 0.0
      %688 = vmatprep.subr.mxu0 0.0
      %689 = vmatpush1.msra.mxu0 0.0
      %690 = vmatprep.subr.mxu0 0.0
      %691 = vmatpush1.msra.mxu0 0.0
      %692 = vmatprep.subr.mxu0 0.0
      %693 = vmatpush1.msra.mxu0 0.0
      %694 = vmatprep.subr.mxu0 0.0
      %695 = vmatpush1.msra.mxu0 0.0
      %696 = vmatprep.subr.mxu0 0.0
      %697 = vmatpush1.msra.mxu0 0.0
      %698 = vmatprep.subr.mxu0 0.0
      %699 = vmatpush1.msra.mxu0 0.0
      %700 = vmatprep.subr.mxu0 0.0
      %701 = vmatpush1.msra.mxu0 0.0
      %702 = vmatprep.subr.mxu0 0.0
      %703 = vmatpush1.msra.mxu0 0.0
      %704 = vmatprep.subr.mxu0 0.0
      %705 = vmatpush1.msra.mxu0 0.0
      %706 = vmatprep.subr.mxu0 0.0
      %707 = vmatpush1.msra.mxu0 0.0
      %708 = vmatprep.subr.mxu0 0.0
      %709 = vmatpush1.msra.mxu0 0.0
      %710 = vmatprep.subr.mxu0 0.0
      %711 = vmatpush1.msra.mxu0 0.0
      %712 = vmatprep.subr.mxu0 0.0
      %713 = vmatpush1.msra.mxu0 0.0
      %714 = vmatprep.subr.mxu0 0.0
      %715 = vmatpush1.msra.mxu0 0.0
      %716 = vmatprep.subr.mxu0 0.0
      %717 = vmatpush1.msra.mxu0 0.0
      %718 = vmatprep.subr.mxu0 0.0
      %719 = vmatpush1.msra.mxu0 0.0
      %720 = vmatprep.subr.mxu0 0.0
      %721 = vmatpush1.msra.mxu0 0.0
      %722 = vmatprep.mubr.f32.mxu0 0.0
      %723 = vmatmul.mubr.f32.gmra.mrb[0].mxu0 %v656
      %v724 = vpop.f32.mrb[0].mxu0
      %v725 = vadd.f32 %v653, %v724
      %v726 = vpop.f32.mrb[0].mxu0
      %v727 = vadd.f32 %v653, %v726
      %728 = vdwg.mxu0
      %729 = vmatprep.subr.mxu0 %v647
      %730 = vmatpush1.msra.mxu0 %v646
      %731 = vmatprep.subr.mxu0 0.0
      %732 = vmatpush1.msra.mxu0 0.0
      %733 = vmatprep.subr.mxu0 0.0
      %734 = vmatpush1.msra.mxu0 0.0
      %735 = vmatprep.subr.mxu0 0.0
      %736 = vmatpush1.msra.mxu0 0.0
      %737 = vmatprep.subr.mxu0 0.0
      %738 = vmatpush1.msra.mxu0 0.0
      %739 = vmatprep.subr.mxu0 0.0
      %740 = vmatpush1.msra.mxu0 0.0
      %741 = vmatprep.subr.mxu0 0.0
      %742 = vmatpush1.msra.mxu0 0.0
      %743 = vmatprep.subr.mxu0 0.0
      %744 = vmatpush1.msra.mxu0 0.0
      %745 = vmatprep.subr.mxu0 0.0
      %746 = vmatpush1.msra.mxu0 0.0
      %747 = vmatprep.subr.mxu0 0.0
      %748 = vmatpush1.msra.mxu0 0.0
      %749 = vmatprep.subr.mxu0 0.0
      %750 = vmatpush1.msra.mxu0 0.0
      %751 = vmatprep.subr.mxu0 0.0
      %752 = vmatpush1.msra.mxu0 0.0
      %753 = vmatprep.subr.mxu0 0.0
      %754 = vmatpush1.msra.mxu0 0.0
      %755 = vmatprep.subr.mxu0 0.0
      %756 = vmatpush1.msra.mxu0 0.0
      %757 = vmatprep.subr.mxu0 0.0
      %758 = vmatpush1.msra.mxu0 0.0
      %759 = vmatprep.subr.mxu0 0.0
      %760 = vmatpush1.msra.mxu0 0.0
      %761 = vmatprep.subr.mxu0 0.0
      %762 = vmatpush1.msra.mxu0 0.0
      %763 = vmatprep.subr.mxu0 0.0
      %764 = vmatpush1.msra.mxu0 0.0
      %765 = vmatprep.subr.mxu0 0.0
      %766 = vmatpush1.msra.mxu0 0.0
      %767 = vmatprep.subr.mxu0 0.0
      %768 = vmatpush1.msra.mxu0 0.0
      %769 = vmatprep.subr.mxu0 0.0
      %770 = vmatpush1.msra.mxu0 0.0
      %771 = vmatprep.subr.mxu0 0.0
      %772 = vmatpush1.msra.mxu0 0.0
      %773 = vmatprep.subr.mxu0 0.0
      %774 = vmatpush1.msra.mxu0 0.0
      %775 = vmatprep.subr.mxu0 0.0
      %776 = vmatpush1.msra.mxu0 0.0
      %777 = vmatprep.subr.mxu0 0.0
      %778 = vmatpush1.msra.mxu0 0.0
      %779 = vmatprep.subr.mxu0 0.0
      %780 = vmatpush1.msra.mxu0 0.0
      %781 = vmatprep.subr.mxu0 0.0
      %782 = vmatpush1.msra.mxu0 0.0
      %783 = vmatprep.subr.mxu0 0.0
      %784 = vmatpush1.msra.mxu0 0.0
      %785 = vmatprep.subr.mxu0 0.0
      %786 = vmatpush1.msra.mxu0 0.0
      %787 = vmatprep.subr.mxu0 0.0
      %788 = vmatpush1.msra.mxu0 0.0
      %789 = vmatprep.subr.mxu0 0.0
      %790 = vmatpush1.msra.mxu0 0.0
      %791 = vmatprep.subr.mxu0 0.0
      %792 = vmatpush1.msra.mxu0 0.0
      %793 = vmatprep.mubr.f32.mxu0 0.0
      %794 = vmatmul.mubr.f32.gmra.mrb[0].mxu0 %v656
      %v795 = vpop.f32.mrb[0].mxu0
      %v796 = vadd.f32 %v653, %v795
      %v797 = vpop.f32.mrb[0].mxu0
      %v798 = vadd.f32 %v653, %v797
      %799 = vdwg.mxu0
      %v800 = vsub.f32 0.0, %v725
      %v801 = vsub.f32 0.0, %v727
      %v802 = vsub.f32 0.0, %v796
      %v803 = vsub.f32 0.0, %v798
      %v804 = vmul.f32 %v800, 1.442695
      %v805 = vpow.pop %v804
      %v806 = vmul.f32 %v801, 1.442695
      %v807 = vpow.pop %v806
      %v808 = vmul.f32 %v802, 1.442695
      %v809 = vpow.pop %v808
      %v810 = vmul.f32 %v803, 1.442695
      %v811 = vpow.pop %v810
      %v812 = vadd.f32 %v805, 1.0
      %v813 = vadd.f32 %v807, 1.0
      %v814 = vadd.f32 %v809, 1.0
      %v815 = vadd.f32 %v811, 1.0
      %v816 = vrcp.pop %v812
      %v817 = vrcp.pop %v813
      %v818 = vrcp.pop %v814
      %v819 = vrcp.pop %v815
      %v820 = vld [vmem:[%s1 + $0x30] sm:$0x1]
      %v821 = vld [vmem:[%s2 + $0x30] sm:$0x1]
      %823 = vset.pattern.permute.xlu0 0
      %824 = vperm.xlu0 %823, %v821
      %v825 = vpop.permute.xlu0 %824
      %vm827 = vcmask 31744
      %v829 = vsel %vm827, %v820, 0
      %vm831 = vcmask 1043456
      %v833 = vsel %vm831, %v816, 0
      %v836 = vsel %vm831, %v817, 0
      %v839 = vsel %vm831, %v818, 0
      %v842 = vsel %vm831, %v819, 0
      %844 = vmatprep.subr.mxu0 %v836
      %845 = vmatpush1.msra.mxu0 %v833
      %846 = vmatprep.subr.mxu0 0.0
      %847 = vmatpush1.msra.mxu0 0.0
      %848 = vmatprep.subr.mxu0 0.0
      %849 = vmatpush1.msra.mxu0 0.0
      %850 = vmatprep.subr.mxu0 0.0
      %851 = vmatpush1.msra.mxu0 0.0
      %852 = vmatprep.subr.mxu0 0.0
      %853 = vmatpush1.msra.mxu0 0.0
      %854 = vmatprep.subr.mxu0 0.0
      %855 = vmatpush1.msra.mxu0 0.0
      %856 = vmatprep.subr.mxu0 0.0
      %857 = vmatpush1.msra.mxu0 0.0
      %858 = vmatprep.subr.mxu0 0.0
      %859 = vmatpush1.msra.mxu0 0.0
      %860 = vmatprep.subr.mxu0 0.0
      %861 = vmatpush1.msra.mxu0 0.0
      %862 = vmatprep.subr.mxu0 0.0
      %863 = vmatpush1.msra.mxu0 0.0
      %864 = vmatprep.subr.mxu0 0.0
      %865 = vmatpush1.msra.mxu0 0.0
      %866 = vmatprep.subr.mxu0 0.0
      %867 = vmatpush1.msra.mxu0 0.0
      %868 = vmatprep.subr.mxu0 0.0
      %869 = vmatpush1.msra.mxu0 0.0
      %870 = vmatprep.subr.mxu0 0.0
      %871 = vmatpush1.msra.mxu0 0.0
      %872 = vmatprep.subr.mxu0 0.0
      %873 = vmatpush1.msra.mxu0 0.0
      %874 = vmatprep.subr.mxu0 0.0
      %875 = vmatpush1.msra.mxu0 0.0
      %876 = vmatprep.subr.mxu0 0.0
      %877 = vmatpush1.msra.mxu0 0.0
      %878 = vmatprep.subr.mxu0 0.0
      %879 = vmatpush1.msra.mxu0 0.0
      %880 = vmatprep.subr.mxu0 0.0
      %881 = vmatpush1.msra.mxu0 0.0
      %882 = vmatprep.subr.mxu0 0.0
      %883 = vmatpush1.msra.mxu0 0.0
      %884 = vmatprep.subr.mxu0 0.0
      %885 = vmatpush1.msra.mxu0 0.0
      %886 = vmatprep.subr.mxu0 0.0
      %887 = vmatpush1.msra.mxu0 0.0
      %888 = vmatprep.subr.mxu0 0.0
      %889 = vmatpush1.msra.mxu0 0.0
      %890 = vmatprep.subr.mxu0 0.0
      %891 = vmatpush1.msra.mxu0 0.0
      %892 = vmatprep.subr.mxu0 0.0
      %893 = vmatpush1.msra.mxu0 0.0
      %894 = vmatprep.subr.mxu0 0.0
      %895 = vmatpush1.msra.mxu0 0.0
      %896 = vmatprep.subr.mxu0 0.0
      %897 = vmatpush1.msra.mxu0 0.0
      %898 = vmatprep.subr.mxu0 0.0
      %899 = vmatpush1.msra.mxu0 0.0
      %900 = vmatprep.subr.mxu0 0.0
      %901 = vmatpush1.msra.mxu0 0.0
      %902 = vmatprep.subr.mxu0 0.0
      %903 = vmatpush1.msra.mxu0 0.0
      %904 = vmatprep.subr.mxu0 0.0
      %905 = vmatpush1.msra.mxu0 0.0
      %906 = vmatprep.subr.mxu0 0.0
      %907 = vmatpush1.msra.mxu0 0.0
      %908 = vmatprep.mubr.f32.mxu0 0.0
      %909 = vmatmul.mubr.f32.gmra.mrb[0].mxu0 %v829
      %v910 = vpop.f32.mrb[0].mxu0
      %v911 = vadd.f32 %v825, %v910
      %v912 = vpop.f32.mrb[0].mxu0
      %v913 = vadd.f32 %v825, %v912
      %914 = vdwg.mxu0
      %915 = vmatprep.subr.mxu0 %v842
      %916 = vmatpush1.msra.mxu0 %v839
      %917 = vmatprep.subr.mxu0 0.0
      %918 = vmatpush1.msra.mxu0 0.0
      %919 = vmatprep.subr.mxu0 0.0
      %920 = vmatpush1.msra.mxu0 0.0
      %921 = vmatprep.subr.mxu0 0.0
      %922 = vmatpush1.msra.mxu0 0.0
      %923 = vmatprep.subr.mxu0 0.0
      %924 = vmatpush1.msra.mxu0 0.0
      %925 = vmatprep.subr.mxu0 0.0
      %926 = vmatpush1.msra.mxu0 0.0
      %927 = vmatprep.subr.mxu0 0.0
      %928 = vmatpush1.msra.mxu0 0.0
      %929 = vmatprep.subr.mxu0 0.0
      %930 = vmatpush1.msra.mxu0 0.0
      %931 = vmatprep.subr.mxu0 0.0
      %932 = vmatpush1.msra.mxu0 0.0
      %933 = vmatprep.subr.mxu0 0.0
      %934 = vmatpush1.msra.mxu0 0.0
      %935 = vmatprep.subr.mxu0 0.0
      %936 = vmatpush1.msra.mxu0 0.0
      %937 = vmatprep.subr.mxu0 0.0
      %938 = vmatpush1.msra.mxu0 0.0
      %939 = vmatprep.subr.mxu0 0.0
      %940 = vmatpush1.msra.mxu0 0.0
      %941 = vmatprep.subr.mxu0 0.0
      %942 = vmatpush1.msra.mxu0 0.0
      %943 = vmatprep.subr.mxu0 0.0
      %944 = vmatpush1.msra.mxu0 0.0
      %945 = vmatprep.subr.mxu0 0.0
      %946 = vmatpush1.msra.mxu0 0.0
      %947 = vmatprep.subr.mxu0 0.0
      %948 = vmatpush1.msra.mxu0 0.0
      %949 = vmatprep.subr.mxu0 0.0
      %950 = vmatpush1.msra.mxu0 0.0
      %951 = vmatprep.subr.mxu0 0.0
      %952 = vmatpush1.msra.mxu0 0.0
      %953 = vmatprep.subr.mxu0 0.0
      %954 = vmatpush1.msra.mxu0 0.0
      %955 = vmatprep.subr.mxu0 0.0
      %956 = vmatpush1.msra.mxu0 0.0
      %957 = vmatprep.subr.mxu0 0.0
      %958 = vmatpush1.msra.mxu0 0.0
      %959 = vmatprep.subr.mxu0 0.0
      %960 = vmatpush1.msra.mxu0 0.0
      %961 = vmatprep.subr.mxu0 0.0
      %962 = vmatpush1.msra.mxu0 0.0
      %963 = vmatprep.subr.mxu0 0.0
      %964 = vmatpush1.msra.mxu0 0.0
      %965 = vmatprep.subr.mxu0 0.0
      %966 = vmatpush1.msra.mxu0 0.0
      %967 = vmatprep.subr.mxu0 0.0
      %968 = vmatpush1.msra.mxu0 0.0
      %969 = vmatprep.subr.mxu0 0.0
      %970 = vmatpush1.msra.mxu0 0.0
      %971 = vmatprep.subr.mxu0 0.0
      %972 = vmatpush1.msra.mxu0 0.0
      %973 = vmatprep.subr.mxu0 0.0
      %974 = vmatpush1.msra.mxu0 0.0
      %975 = vmatprep.subr.mxu0 0.0
      %976 = vmatpush1.msra.mxu0 0.0
      %977 = vmatprep.subr.mxu0 0.0
      %978 = vmatpush1.msra.mxu0 0.0
      %979 = vmatprep.mubr.f32.mxu0 0.0
      %980 = vmatmul.mubr.f32.gmra.mrb[0].mxu0 %v829
      %v981 = vpop.f32.mrb[0].mxu0
      %v982 = vadd.f32 %v825, %v981
      %v983 = vpop.f32.mrb[0].mxu0
      %v984 = vadd.f32 %v825, %v983
      %985 = vdwg.mxu0
      %v986 = vsub.f32 0.0, %v911
      %v987 = vsub.f32 0.0, %v913
      %v988 = vsub.f32 0.0, %v982
      %v989 = vsub.f32 0.0, %v984
      %v990 = vmul.f32 %v986, 1.442695
      %v991 = vpow.pop %v990
      %v992 = vmul.f32 %v987, 1.442695
      %v993 = vpow.pop %v992
      %v994 = vmul.f32 %v988, 1.442695
      %v995 = vpow.pop %v994
      %v996 = vmul.f32 %v989, 1.442695
      %v997 = vpow.pop %v996
      %v998 = vadd.f32 %v991, 1.0
      %v999 = vadd.f32 %v993, 1.0
      %v1000 = vadd.f32 %v995, 1.0
      %v1001 = vadd.f32 %v997, 1.0
      %v1002 = vrcp.pop %v998
      %v1003 = vrcp.pop %v999
      %v1004 = vrcp.pop %v1000
      %v1005 = vrcp.pop %v1001
      %v1010 = vcombine.low %v1002, %v1003
      %v1011 = vcombine.low %v1004, %v1005
      %v1013 = vunpack.c.l.s4 1966171168
      %v1014 = vunpack.c.0.s8 %v1013
      %v1015 = vlaneseq
      %v1016 = vshrl.u32 %v1015, 7
      %v1017 = vsub.s32 %v1014, %v1016
      %v1018 = vrot.slane %v1010, %v1017
      %v1020 = vunpack.c.l.s4 1966171168
      %v1021 = vunpack.c.0.s8 %v1020
      %v1022 = vlaneseq
      %v1023 = vshrl.u32 %v1022, 7
      %v1024 = vsub.s32 %v1021, %v1023
      %v1025 = vrot.slane %v1011, %v1024
      %v1026 = vcombine.low %v1018, %v1025
      %v1028 = vunpack.c.l.s4 1966171168
      %v1029 = vunpack.c.0.s8 %v1028
      %v1030 = vlaneseq
      %v1031 = vshrl.u32 %v1030, 7
      %v1032 = vsub.s32 %v1029, %v1031
      %v1033 = vrot.slane %v1026, %v1032
      %v1035 = vlaneseq
      %vm1036 = vcmp.ge.s32.totalorder %v1035, 0
      %vm1037 = vcmp.lt.s32.totalorder %v1035, 512
      %vm1038 = vmand %vm1036, %vm1037
      %1039 = vst.msk [vmem:[%s170] sm:$0xf] %vm1038, %v1033
      %s1040 = smul.u32 4, %s14
      %p1041 = scmp.lt.s32.totalorder %s1040, 7
      %s1042 = scalar_select %p1041, %s1040, 7
      %s1043 = scalar_lea.vmem %s3, %s1042
      // Predicated region
      $region33: #{dnn_forward.1} parent=31 // pred_check
        %p1044 = pneg %p100
      $region34: #{dnn_forward.1} parent=31 // pred_check_branch
        %1046 = sbr.rel (%p1044) target = $region36
      $region35: #{dnn_forward.1} parent=31 // pred_region
        %s1047 = smul.u32 4, %s14
      $region36: #{dnn_forward.1} parent=31 // pred_fallthru
        _
    $region32: #{dnn_forward.1} parent=5 // pred_fallthru
      _
    %p1048 = scmp.le.s32.totalorder 2, %s9
    // Predicated region
    $region37: #{dnn_forward.1} parent=5 // pred_check
      %p1049 = pneg %p1048
    $region38: #{dnn_forward.1} parent=5 // pred_check_branch
      %1051 = sbr.rel (%p1049) target = $region40
    $region39: #{dnn_forward.1} parent=5 // pred_region
      %s1052 = ssub.s32 %s9, 2
      // Predicated region
      $region41: #{dnn_forward.1} parent=39 // pred_check
        %p1053 = pneg %p106
      $region42: #{dnn_forward.1} parent=39 // pred_check_branch
        %1055 = sbr.rel (%p1053) target = $region44
      $region43: #{dnn_forward.1} parent=39 // pred_region
        %s1056 = smul.u32 4, %s15
        %p1057 = scmp.lt.s32.totalorder %s1056, 7
        %s1058 = scalar_select %p1057, %s1056, 7
        %s1059 = scalar_lea.vmem %s3, %s1058
      $region44: #{dnn_forward.1} parent=39 // pred_fallthru
        _
    $region40: #{dnn_forward.1} parent=5 // pred_fallthru
      _
  $region6: #{dnn_forward.1} parent=0 // loop_footer
    %s13 = sadd.s32 1, %s9
  $region7: #{dnn_forward.1} parent=0 // loop_footer_branch
    %8 = sbr.rel target = $region3
  $region8: #{dnn_forward.1} parent=0 // loop_exit
    _

</llo_original>
